<compile_context>
chip_gen: v6e
topology: v6e:2x2x1
jax: 0.10.0
libtpu: 0.0.40
codegen_flags: <defaults>
</compile_context>

<pallas_src>
import functools

import jax
import jax.numpy as jnp
from jax.experimental import pallas as pl
from jax.experimental.pallas import tpu as pltpu

_LANES = 128  # lane-dense output block width (unmasked vst)


def _ce_partial_kernel(pred_ref, label_ref, out_ref, *, n_total, ignore_index):
    # pred_ref : [TN, C]  logits, native dtype (f32 math in-kernel)
    # label_ref: [TN, 1]  int32 class ids
    # out_ref  : [1, 1, 128] f32; lane 0 = partial loss sum, lane 1 = valid count
    i = pl.program_id(0)

    logits = pred_ref[...].astype(jnp.float32)                    # [TN, C]
    labels = label_ref[...]                                       # [TN, 1]
    tn, c = logits.shape

    # Numerically stable per-row CE: loss = log(sum(exp(x - max))) - (x[y] - max)
    row_max = jnp.max(logits, axis=-1, keepdims=True)              # [TN, 1]
    shifted = logits - row_max                                     # [TN, C]
    sum_exp = jnp.sum(jnp.exp(shifted), axis=-1, keepdims=True)    # [TN, 1]

    class_ids = jax.lax.broadcasted_iota(jnp.int32, (tn, c), 1)    # [TN, C]
    picked_shifted = jnp.sum(
        jnp.where(class_ids == labels, shifted, 0.0),
        axis=-1, keepdims=True)                                    # [TN, 1]

    loss_per_row = jnp.log(sum_exp) - picked_shifted               # [TN, 1]

    # Mask padding rows of the last tile and ignored labels (-100 by default).
    row_ids = jax.lax.broadcasted_iota(jnp.int32, (tn, 1), 0)      # [TN, 1]
    in_bounds = (i * tn + row_ids) < n_total
    valid = jnp.logical_and(in_bounds, labels != ignore_index)

    tile_sum = jnp.sum(jnp.where(valid, loss_per_row, 0.0))
    tile_cnt = jnp.sum(jnp.where(valid, 1.0, 0.0))

    lane = jax.lax.broadcasted_iota(jnp.int32, (1, 1, _LANES), 2)
    out_ref[...] = jnp.where(lane == 0, tile_sum,
                             jnp.where(lane == 1, tile_cnt, 0.0))


def cite_criterion(pred, label, *, tile_n=256, ignore_index=-100):
    """Mean cross-entropy (torch.nn.CrossEntropyLoss defaults, weight=None).

    pred : [N, C] float logits (any float dtype; DMA'd natively).
    label: [N] int class ids; entries equal to ignore_index are excluded from
           both the loss sum and the mean's denominator.
    """
    n, c = pred.shape
    tn = n if n <= tile_n else tile_n          # tile_n is a multiple of 8/16
    num_tiles = pl.cdiv(n, tn)
    label2d = label.astype(jnp.int32).reshape(n, 1)

    kernel = functools.partial(
        _ce_partial_kernel, n_total=n, ignore_index=ignore_index)

    cost = pl.CostEstimate(
        flops=6 * n * c,
        transcendentals=n * c + n,              # exp per element + log per row
        bytes_accessed=n * c * pred.dtype.itemsize + n * 4
        + num_tiles * _LANES * 4,
    )

    partials = pl.pallas_call(
        kernel,
        out_shape=jax.ShapeDtypeStruct((num_tiles, 1, _LANES), jnp.float32),
        grid=(num_tiles,),
        in_specs=[
            pl.BlockSpec((tn, c), lambda i: (i, 0)),
            pl.BlockSpec((tn, 1), lambda i: (i, 0)),
        ],
        out_specs=pl.BlockSpec((1, 1, _LANES), lambda i: (i, 0, 0)),
        compiler_params=pltpu.CompilerParams(
            dimension_semantics=("parallel",),   # shard tiles across TCs (v7x)
            vmem_limit_bytes=48 * 1024 * 1024,   # fits v7x's 64 MiB; headroom on v5e/v6e
        ),
        cost_estimate=cost,
    )(pred, label2d)

    loss_sum = jnp.sum(partials[:, 0, 0])
    valid_cnt = jnp.sum(partials[:, 0, 1])
    return loss_sum / valid_cnt


if __name__ == "__main__":
    key = jax.random.PRNGKey(0)
    k_pred, k_label = jax.random.split(key)

    # Small demo: N=70 rows (graph nodes), C=32 classes; tile_n=32 exercises the
    # multi-tile path (3 tiles) plus last-tile padding masking (70 % 32 != 0).
    N, C = 70, 32
    pred = jax.random.normal(k_pred, (N, C), dtype=jnp.float32)
    label = jax.random.randint(k_label, (N,), 0, C, dtype=jnp.int32)
    label = label.at[5].set(-100)  # exercise torch's default ignore_index

    loss = cite_criterion(pred, label, tile_n=32)
    jax.block_until_ready(loss)

    # Reference: plain-JAX CE matching torch.nn.CrossEntropyLoss (mean over
    # non-ignored rows, ignore_index=-100).
    logp = jax.nn.log_softmax(pred.astype(jnp.float32), axis=-1)
    valid = label != -100
    safe = jnp.where(valid, label, 0)
    per_row = -logp[jnp.arange(N), safe]
    ref = jnp.sum(jnp.where(valid, per_row, 0.0)) / jnp.sum(valid)
    assert jnp.allclose(loss, ref, atol=1e-5, rtol=1e-5), (loss, ref)

    print("KERNEL_OK")
</pallas_src>

<mosaic_0001>
module attributes {stable_mosaic.version = 11 : i64} {
  func.func @_ce_partial_kernel(%arg0: i32, %arg1: memref<32x32xf32, #tpu.memory_space<vmem>>, %arg2: memref<32x1xi32, #tpu.memory_space<vmem>>, %arg3: memref<1x1x128xf32, #tpu.memory_space<vmem>>) attributes {dimension_semantics = [#tpu.dimension_semantics<parallel>], iteration_bounds = array<i64: 3>, scalar_prefetch = 0 : i64, scratch_operands = 0 : i64, tpu.core_type = #tpu.core_type<tc>, window_params = [{transform_indices = @transform_0, window_bounds = array<i64: 32, 32>}, {transform_indices = @transform_1, window_bounds = array<i64: 32, 1>}, {transform_indices = @transform_2, window_bounds = array<i64: 1, 1, 128>}]} {
    %c0 = arith.constant 0 : index
    %c0_0 = arith.constant 0 : index
    %0 = vector.load %arg1[%c0, %c0_0] : memref<32x32xf32, #tpu.memory_space<vmem>>, vector<32x32xf32>
    %c0_1 = arith.constant 0 : index
    %c0_2 = arith.constant 0 : index
    %1 = vector.load %arg2[%c0_1, %c0_2] : memref<32x1xi32, #tpu.memory_space<vmem>>, vector<32x1xi32>
    %cst = arith.constant dense<0xFF800000> : vector<32xf32>
    %2 = vector.multi_reduction <maximumf>, %0, %cst [1] : vector<32x32xf32> to vector<32xf32>
    %3 = vector.shape_cast %2 : vector<32xf32> to vector<32x1xf32>
    %4 = vector.broadcast %3 : vector<32x1xf32> to vector<32x32xf32>
    %5 = arith.subf %0, %4 : vector<32x32xf32>
    %6 = math.exp %5 : vector<32x32xf32>
    %cst_3 = arith.constant dense<0.000000e+00> : vector<32xf32>
    %7 = vector.multi_reduction <add>, %6, %cst_3 [1] : vector<32x32xf32> to vector<32xf32>
    %8 = vector.shape_cast %7 : vector<32xf32> to vector<32x1xf32>
    %9 = tpu.iota {dimensions = array<i32: 1>} : vector<32x32xi32>
    %10 = vector.broadcast %1 : vector<32x1xi32> to vector<32x32xi32>
    %11 = arith.cmpi eq, %9, %10 : vector<32x32xi32>
    %cst_4 = arith.constant 0.000000e+00 : f32
    %12 = vector.broadcast %cst_4 : f32 to vector<32x32xf32>
    %13 = arith.select %11, %5, %12 : vector<32x32xi1>, vector<32x32xf32>
    %cst_5 = arith.constant dense<0.000000e+00> : vector<32xf32>
    %14 = vector.multi_reduction <add>, %13, %cst_5 [1] : vector<32x32xf32> to vector<32xf32>
    %15 = vector.shape_cast %14 : vector<32xf32> to vector<32x1xf32>
    %16 = math.log %8 : vector<32x1xf32>
    %17 = arith.subf %16, %15 : vector<32x1xf32>
    %18 = tpu.iota {dimensions = array<i32: 0>} : vector<32x1xi32>
    %c32_i32 = arith.constant 32 : i32
    %19 = arith.muli %arg0, %c32_i32 : i32
    %20 = vector.broadcast %19 : i32 to vector<32x1xi32>
    %21 = arith.addi %20, %18 : vector<32x1xi32>
    %c70_i32 = arith.constant 70 : i32
    %22 = vector.broadcast %c70_i32 : i32 to vector<32x1xi32>
    %23 = arith.cmpi slt, %21, %22 : vector<32x1xi32>
    %c-100_i32 = arith.constant -100 : i32
    %24 = vector.broadcast %c-100_i32 : i32 to vector<32x1xi32>
    %25 = arith.cmpi ne, %1, %24 : vector<32x1xi32>
    %26 = arith.andi %23, %25 : vector<32x1xi1>
    %cst_6 = arith.constant 0.000000e+00 : f32
    %27 = vector.broadcast %cst_6 : f32 to vector<32x1xf32>
    %28 = arith.select %26, %17, %27 : vector<32x1xi1>, vector<32x1xf32>
    %29 = vector.shape_cast %28 : vector<32x1xf32> to vector<1x32x1xf32>
    %cst_7 = arith.constant dense<0.000000e+00> : vector<1xf32>
    %30 = vector.multi_reduction <add>, %29, %cst_7 [1, 2] : vector<1x32x1xf32> to vector<1xf32>
    %31 = vector.shape_cast %30 : vector<1xf32> to vector<1x1x1xf32>
    %32 = vector.extract %31[0, 0, 0] : f32 from vector<1x1x1xf32>
    %cst_8 = arith.constant 1.000000e+00 : f32
    %cst_9 = arith.constant 0.000000e+00 : f32
    %33 = vector.broadcast %cst_8 : f32 to vector<32x1xf32>
    %34 = vector.broadcast %cst_9 : f32 to vector<32x1xf32>
    %35 = arith.select %26, %33, %34 : vector<32x1xi1>, vector<32x1xf32>
    %36 = vector.shape_cast %35 : vector<32x1xf32> to vector<1x32x1xf32>
    %cst_10 = arith.constant dense<0.000000e+00> : vector<1xf32>
    %37 = vector.multi_reduction <add>, %36, %cst_10 [1, 2] : vector<1x32x1xf32> to vector<1xf32>
    %38 = vector.shape_cast %37 : vector<1xf32> to vector<1x1x1xf32>
    %39 = vector.extract %38[0, 0, 0] : f32 from vector<1x1x1xf32>
    %40 = tpu.iota {dimensions = array<i32: 2>} : vector<1x1x128xi32>
    %c0_i32 = arith.constant 0 : i32
    %41 = vector.broadcast %c0_i32 : i32 to vector<1x1x128xi32>
    %42 = arith.cmpi eq, %40, %41 : vector<1x1x128xi32>
    %c1_i32 = arith.constant 1 : i32
    %43 = vector.broadcast %c1_i32 : i32 to vector<1x1x128xi32>
    %44 = arith.cmpi eq, %40, %43 : vector<1x1x128xi32>
    %cst_11 = arith.constant 0.000000e+00 : f32
    %45 = vector.broadcast %39 : f32 to vector<1x1x128xf32>
    %46 = vector.broadcast %cst_11 : f32 to vector<1x1x128xf32>
    %47 = arith.select %44, %45, %46 : vector<1x1x128xi1>, vector<1x1x128xf32>
    %48 = vector.broadcast %32 : f32 to vector<1x1x128xf32>
    %49 = arith.select %42, %48, %47 : vector<1x1x128xi1>, vector<1x1x128xf32>
    %c0_12 = arith.constant 0 : index
    %c0_13 = arith.constant 0 : index
    %c0_14 = arith.constant 0 : index
    %50 = vector.load %arg3[%c0_12, %c0_13, %c0_14] : memref<1x1x128xf32, #tpu.memory_space<vmem>>, vector<1x1x128xf32>
    tpu.vector_store %arg3[%c0_12, %c0_13, %c0_14], %49 {strides = array<i32>} : memref<1x1x128xf32, #tpu.memory_space<vmem>>, vector<1x1x128xf32>,
    return
  }
  func.func @transform_0(%arg0: i32) -> (i32, i32) {
    %c0_i32 = arith.constant 0 : i32
    %c0_i32_0 = arith.constant 0 : i32
    return %arg0, %c0_i32 : i32, i32
  }
  func.func @transform_1(%arg0: i32) -> (i32, i32) {
    %c0_i32 = arith.constant 0 : i32
    %c0_i32_0 = arith.constant 0 : i32
    return %arg0, %c0_i32 : i32, i32
  }
  func.func @transform_2(%arg0: i32) -> (i32, i32, i32) {
    %c0_i32 = arith.constant 0 : i32
    %c0_i32_0 = arith.constant 0 : i32
    %c0_i32_1 = arith.constant 0 : i32
    return %arg0, %c0_i32, %c0_i32_0 : i32, i32, i32
  }
}

</mosaic_0001>

<llo_original>
// kernel: tpu_custom_call.1
$region0: #{tpu_custom_call.1}
  #allocation0 [shape = 'u32[]', space=smem, size = 0x4, offset = 0x4, fixed_abs, tag = 'smem constant byte address 0x4 - core index']
  #allocation1 [shape = 'u32[144,128]{1,0:T(1,128)}', space=vmem, size = 0x12000, scoped, tag = 'internal scratch']
  %s0 = inlined_call_operand.vmem [shape: f32[70,32], index: 0, kind: input, shape index: {}]
  %s1 = inlined_call_operand.vmem [shape: s32[70,1], index: 1, kind: input, shape index: {}]
  %s2 = inlined_call_operand.hbm [shape: f32[3,1,128], index: 2, kind: output, shape index: {}]
  %s3 = sld [smem:[#allocation0]]
  $region41: #{tpu_custom_call.1} parent=0
    _
  %s5 = ssub.s32 1, %s3
  %s6 = scalar_select 0, %s5, %s3
  $region1: #{tpu_custom_call.1} parent=0
    #allocation2 [shape = 'u8[1024]{0}', space=vmem, size = 0x400, scoped, tag = 'output window, operand 0']
    #allocation3 [shape = 's32[2]{0}', space=sflag, size = 0x8, scoped, tag = 'scoped memory for tpu_custom_call.1']
    %7 = vsyncpa [#allocation3], 0
    %s8 = scalar_lea.sflag [#allocation3], 1
    %9 = vsyncpa %s8, 0
    loop: start=0, step=1, limit=5
    $region2: #{tpu_custom_call.1} parent=1 // loop_pre_header
      _
    $region3: #{tpu_custom_call.1} parent=1 // loop_header
      %s11 = sphi 0, %s15
      %p12 = scmp.ge.s32.totalorder %s11, 5
      %s21 = sphi 0, %s23
      %s24 = sphi 0, %s21
      %s25 = sphi 0, %s24
      %s41 = sphi 0, %s25
      %s47 = sphi 0, %s49
      %s50 = sphi 0, %s47
      %s51 = sphi 0, %s50
      %s67 = sphi 0, %s51
      %s73 = sphi 0, %s75
      %s76 = sphi 0, %s73
      %s77 = sphi 0, %s76
      %s93 = sphi 0, %s77
    $region4: #{tpu_custom_call.1} parent=1 // loop_header_branch
      %14 = sbr.rel (%p12) target = $region8
    $region5: #{tpu_custom_call.1} parent=1 // loop_body
      %s16 = ssub.s32 %s11, 1
      %s17 = ssub.s32 %s11, 2
      %s18 = sadd.s32 %s11, 1
      %s19 = ssub.s32 %s11, %s18
      %p20 = scmp.eq.s32.totalorder %s19, 0
      %s22 = sadd.s32 %s21, 1
      %s23 = scalar_select %p20, %s21, %s22
      %p26 = pneg %p20
      %p27 = scmp.eq.s32.totalorder %s11, 2
      %p28 = por %p26, %p27
      %p29 = scmp.ne.s32.totalorder %s21, %s24
      %p30 = scmp.eq.s32.totalorder %s11, 0
      %p31 = por %p29, %p30
      %p32 = scmp.ne.s32.totalorder %s21, %s24
      %p33 = scmp.eq.s32.totalorder %s16, 2
      %p34 = por %p32, %p33
      %p35 = scmp.ne.s32.totalorder %s24, %s25
      %p36 = scmp.eq.s32.totalorder %s16, 0
      %p37 = por %p35, %p36
      %p38 = scmp.ne.s32.totalorder %s24, %s25
      %p39 = scmp.eq.s32.totalorder %s17, 2
      %p40 = por %p38, %p39
      %p42 = scmp.ne.s32.totalorder %s25, %s41
      %p43 = scmp.eq.s32.totalorder %s17, 0
      %p44 = por %p42, %p43
      %s45 = ssub.s32 %s11, %s18
      %p46 = scmp.eq.s32.totalorder %s45, 0
      %s48 = sadd.s32 %s47, 1
      %s49 = scalar_select %p46, %s47, %s48
      %p52 = pneg %p46
      %p53 = scmp.eq.s32.totalorder %s11, 2
      %p54 = por %p52, %p53
      %p55 = scmp.ne.s32.totalorder %s47, %s50
      %p56 = scmp.eq.s32.totalorder %s11, 0
      %p57 = por %p55, %p56
      %p58 = scmp.ne.s32.totalorder %s47, %s50
      %p59 = scmp.eq.s32.totalorder %s16, 2
      %p60 = por %p58, %p59
      %p61 = scmp.ne.s32.totalorder %s50, %s51
      %p62 = scmp.eq.s32.totalorder %s16, 0
      %p63 = por %p61, %p62
      %p64 = scmp.ne.s32.totalorder %s50, %s51
      %p65 = scmp.eq.s32.totalorder %s17, 2
      %p66 = por %p64, %p65
      %p68 = scmp.ne.s32.totalorder %s51, %s67
      %p69 = scmp.eq.s32.totalorder %s17, 0
      %p70 = por %p68, %p69
      %s71 = ssub.s32 %s11, %s18
      %p72 = scmp.eq.s32.totalorder %s71, 0
      %s74 = sadd.s32 %s73, 1
      %s75 = scalar_select %p72, %s73, %s74
      %p78 = pneg %p72
      %p79 = scmp.eq.s32.totalorder %s11, 2
      %p80 = por %p78, %p79
      %p81 = scmp.ne.s32.totalorder %s73, %s76
      %p82 = scmp.eq.s32.totalorder %s11, 0
      %p83 = por %p81, %p82
      %p84 = scmp.ne.s32.totalorder %s73, %s76
      %p85 = scmp.eq.s32.totalorder %s16, 2
      %p86 = por %p84, %p85
      %p87 = scmp.ne.s32.totalorder %s76, %s77
      %p88 = scmp.eq.s32.totalorder %s16, 0
      %p89 = por %p87, %p88
      %p90 = scmp.ne.s32.totalorder %s76, %s77
      %p91 = scmp.eq.s32.totalorder %s17, 2
      %p92 = por %p90, %p91
      %p94 = scmp.ne.s32.totalorder %s77, %s93
      %p95 = scmp.eq.s32.totalorder %s17, 0
      %p96 = por %p94, %p95
      %p97 = scmp.le.s32.totalorder 1, %s11
      %p98 = scmp.lt.s32.totalorder %s11, 4
      %p99 = pnand %p97, %p98
      %p100 = pneg %p99
      // Predicated region
      $region9: #{tpu_custom_call.1} parent=5 // pred_check
        _
      $region10: #{tpu_custom_call.1} parent=5 // pred_check_branch
        %102 = sbr.rel (%p99) target = $region12
      $region11: #{tpu_custom_call.1} parent=5 // pred_region
        %s103 = ssub.s32 %s11, 1
      $region12: #{tpu_custom_call.1} parent=5 // pred_fallthru
        _
      %p104 = scmp.lt.s32.totalorder %s11, 3
      // Predicated region
      $region13: #{tpu_custom_call.1} parent=5 // pred_check
        %p105 = pneg %p104
      $region14: #{tpu_custom_call.1} parent=5 // pred_check_branch
        %107 = sbr.rel (%p105) target = $region16
      $region15: #{tpu_custom_call.1} parent=5 // pred_region
        // Predicated region
        $region17: #{tpu_custom_call.1} parent=15 // pred_check
          %p108 = pneg %p31
        $region18: #{tpu_custom_call.1} parent=15 // pred_check_branch
          %110 = sbr.rel (%p108) target = $region20
        $region19: #{tpu_custom_call.1} parent=15 // pred_region
          %s111 = smul.u32 4, %s11
          %s112 = ssub.s32 9, %s111
          %p113 = scmp.lt.s32.totalorder %s112, 4
          %s114 = scalar_select %p113, %s112, 4
          %s115 = smul.u32 128, %s114
          %p116 = scmp.lt.s32.totalorder %s111, 8
          %s117 = scalar_select %p116, %s111, 8
          %s118 = smul.addr %s117, 8
          %s119 = scalar_lea.vmem %s0, %s118
          %s120 = smul.u32 4, %s11
          %s121 = ssub.s32 9, %s120
          %p122 = scmp.lt.s32.totalorder %s121, 4
          %s123 = scalar_select %p122, %s121, 4
          %s124 = smul.u32 128, %s123
        $region20: #{tpu_custom_call.1} parent=15 // pred_fallthru
          _
        // Predicated region
        $region21: #{tpu_custom_call.1} parent=15 // pred_check
          %p125 = pneg %p57
        $region22: #{tpu_custom_call.1} parent=15 // pred_check_branch
          %127 = sbr.rel (%p125) target = $region24
        $region23: #{tpu_custom_call.1} parent=15 // pred_region
          %s128 = smul.u32 4, %s11
          %s129 = ssub.s32 9, %s128
          %p130 = scmp.lt.s32.totalorder %s129, 4
          %s131 = scalar_select %p130, %s129, 4
          %s132 = smul.u32 128, %s131
          %p133 = scmp.lt.s32.totalorder %s128, 8
          %s134 = scalar_select %p133, %s128, 8
          %s135 = smul.addr %s134, 8
          %s136 = scalar_lea.vmem %s1, %s135
          %s137 = smul.u32 4, %s11
          %s138 = ssub.s32 9, %s137
          %p139 = scmp.lt.s32.totalorder %s138, 4
          %s140 = scalar_select %p139, %s138, 4
          %s141 = smul.u32 128, %s140
        $region24: #{tpu_custom_call.1} parent=15 // pred_fallthru
          _
      $region16: #{tpu_custom_call.1} parent=5 // pred_fallthru
        _
      %p142 = scmp.le.s32.totalorder 1, %s11
      %p143 = scmp.lt.s32.totalorder %s11, 4
      %p144 = pnand %p142, %p143
      %p145 = pneg %p144
      // Predicated region
      $region25: #{tpu_custom_call.1} parent=5 // pred_check
        _
      $region26: #{tpu_custom_call.1} parent=5 // pred_check_branch
        %147 = sbr.rel (%p144) target = $region28
      $region27: #{tpu_custom_call.1} parent=5 // pred_region
        %s148 = ssub.s32 %s11, 1
        %s149 = smul.u32 4, %s16
        %s150 = ssub.s32 9, %s149
        %p151 = scmp.lt.s32.totalorder %s150, 4
        %s152 = scalar_select %p151, %s150, 4
        %s153 = smul.u32 128, %s152
        %p154 = scmp.lt.s32.totalorder %s149, 8
        %s155 = scalar_select %p154, %s149, 8
        %s156 = smul.addr %s155, 8
        %s157 = scalar_lea.vmem %s0, %s156
        %p158 = pneg %p37
        %p159 = pneg %p34
        %s160 = smul.u32 4, %s16
        %s161 = ssub.s32 9, %s160
        %p162 = scmp.lt.s32.totalorder %s161, 4
        %s163 = scalar_select %p162, %s161, 4
        %s164 = smul.u32 128, %s163
        %p165 = scmp.lt.s32.totalorder %s160, 8
        %s166 = scalar_select %p165, %s160, 8
        %s167 = smul.addr %s166, 8
        %s168 = scalar_lea.vmem %s1, %s167
        %p169 = pneg %p63
        %p170 = pneg %p60
        %p171 = pneg %p89
        %p172 = pneg %p86
        %s173 = sand.u32 %s76, 1
        %s174 = scalar_lea.sflag [#allocation3], %s173
        %s175 = sand.u32 %s76, 1
        %s176 = scalar_lea.vmem [#allocation2], %s175
        %s177 = smul.u32 4, %s16
        %s178 = ssub.s32 9, %s177
        %p179 = scmp.lt.s32.totalorder %s178, 4
        %s180 = scalar_select %p179, %s178, 4
        %s181 = smul.u32 128, %s180
        %p182 = scmp.lt.s32.totalorder %s177, 8
        %s183 = scalar_select %p182, %s177, 8
        %s184 = smul.addr %s183, 8
        %s185 = scalar_lea.vmem %s0, %s184
        %s186 = smul.u32 4, %s16
        %s187 = ssub.s32 9, %s186
        %p188 = scmp.lt.s32.totalorder %s187, 4
        %s189 = scalar_select %p188, %s187, 4
        %s190 = smul.u32 128, %s189
        %s191 = smul.u32 4, %s16
        %s192 = ssub.s32 9, %s191
        %p193 = scmp.lt.s32.totalorder %s192, 4
        %s194 = scalar_select %p193, %s192, 4
        %s195 = smul.u32 128, %s194
        %p196 = scmp.lt.s32.totalorder %s191, 8
        %s197 = scalar_select %p196, %s191, 8
        %s198 = smul.addr %s197, 8
        %s199 = scalar_lea.vmem %s1, %s198
        %s200 = smul.u32 4, %s16
        %s201 = ssub.s32 9, %s200
        %p202 = scmp.lt.s32.totalorder %s201, 4
        %s203 = scalar_select %p202, %s201, 4
        %s204 = smul.u32 128, %s203
        %v205 = vld [vmem:[%s185] sm:$0xff]
        %v206 = vld [vmem:[%s185 + $0x8] sm:$0xff]
        %v207 = vld [vmem:[%s185 + $0x10] sm:$0xff]
        %v208 = vld [vmem:[%s185 + $0x18] sm:$0xff]
        %v209 = vld [vmem:[%s199] sm:$0xff]
        %v210 = vld [vmem:[%s199 + $0x8] sm:$0xff]
        %v211 = vld [vmem:[%s199 + $0x10] sm:$0xff]
        %v212 = vld [vmem:[%s199 + $0x18] sm:$0xff]
        %vm213 = vcmask 261120
        %v214 = vsel %vm213, %v205, -inf
        %215 = vmax.xlane.f32.xlu0 %v214
        %v216 = vpop.xlane.xlu0 %215
        %v217 = vsel %vm213, %v206, -inf
        %218 = vmax.xlane.f32.xlu0 %v217
        %v219 = vpop.xlane.xlu0 %218
        %v220 = vsel %vm213, %v207, -inf
        %221 = vmax.xlane.f32.xlu0 %v220
        %v222 = vpop.xlane.xlu0 %221
        %v223 = vsel %vm213, %v208, -inf
        %224 = vmax.xlane.f32.xlu0 %v223
        %v225 = vpop.xlane.xlu0 %224
        %v226 = vsub.f32 %v205, %v216
        %v227 = vsub.f32 %v206, %v219
        %v228 = vsub.f32 %v207, %v222
        %v229 = vsub.f32 %v208, %v225
        %v230 = vmul.f32 %v226, 1.442695
        %v231 = vpow.pop %v230
        %v232 = vmul.f32 %v227, 1.442695
        %v233 = vpow.pop %v232
        %v234 = vmul.f32 %v228, 1.442695
        %v235 = vpow.pop %v234
        %v236 = vmul.f32 %v229, 1.442695
        %v237 = vpow.pop %v236
        %v238 = vsel %vm213, %v231, 0.0
        %239 = vadd.xlane.f32.xlu0 %v238
        %v240 = vpop.xlane.xlu0 %239
        %v241 = vsel %vm213, %v233, 0.0
        %242 = vadd.xlane.f32.xlu0 %v241
        %v243 = vpop.xlane.xlu0 %242
        %v244 = vsel %vm213, %v235, 0.0
        %245 = vadd.xlane.f32.xlu0 %v244
        %v246 = vpop.xlane.xlu0 %245
        %v247 = vsel %vm213, %v237, 0.0
        %248 = vadd.xlane.f32.xlu0 %v247
        %v249 = vpop.xlane.xlu0 %248
        %v250 = vlaneseq
        %v251 = vand.u32 %v250, 127
        %252 = vset.pattern.permute.xlu0 0
        %253 = vperm.xlu0 %252, %v209
        %v254 = vpop.permute.xlu0 %253
        %255 = vset.pattern.permute.xlu0 0
        %256 = vperm.xlu0 %255, %v210
        %v257 = vpop.permute.xlu0 %256
        %258 = vset.pattern.permute.xlu0 0
        %259 = vperm.xlu0 %258, %v211
        %v260 = vpop.permute.xlu0 %259
        %261 = vset.pattern.permute.xlu0 0
        %262 = vperm.xlu0 %261, %v212
        %v263 = vpop.permute.xlu0 %262
        %vm264 = vcmp.eq.s32.totalorder %v251, %v254
        %vm265 = vcmp.eq.s32.totalorder %v251, %v257
        %vm266 = vcmp.eq.s32.totalorder %v251, %v260
        %vm267 = vcmp.eq.s32.totalorder %v251, %v263
        %v268 = vsel %vm264, %v226, 0.0
        %v269 = vsel %vm265, %v227, 0.0
        %v270 = vsel %vm266, %v228, 0.0
        %v271 = vsel %vm267, %v229, 0.0
        %v272 = vsel %vm213, %v268, 0.0
        %273 = vadd.xlane.f32.xlu0 %v272
        %v274 = vpop.xlane.xlu0 %273
        %v275 = vsel %vm213, %v269, 0.0
        %276 = vadd.xlane.f32.xlu0 %v275
        %v277 = vpop.xlane.xlu0 %276
        %v278 = vsel %vm213, %v270, 0.0
        %279 = vadd.xlane.f32.xlu0 %v278
        %v280 = vpop.xlane.xlu0 %279
        %v281 = vsel %vm213, %v271, 0.0
        %282 = vadd.xlane.f32.xlu0 %v281
        %v283 = vpop.xlane.xlu0 %282
        %v284 = vlog2.pop %v240
        %v285 = vmul.f32 %v284, 0.6931472
        %v286 = vlog2.pop %v243
        %v287 = vmul.f32 %v286, 0.6931472
        %v288 = vlog2.pop %v246
        %v289 = vmul.f32 %v288, 0.6931472
        %v290 = vlog2.pop %v249
        %v291 = vmul.f32 %v290, 0.6931472
        %v292 = vsub.f32 %v285, %v274
        %v293 = vsub.f32 %v287, %v277
        %v294 = vsub.f32 %v289, %v280
        %v295 = vsub.f32 %v291, %v283
        %v296 = vlaneseq
        %v297 = vshrl.u32 %v296, 7
        %v298 = vadd.s32 %v297, 8
        %v299 = vadd.s32 %v297, 16
        %v300 = vadd.s32 %v297, 24
        %s301 = smul.u32 %s16, 32
        %v302 = vstv %s301
        %v303 = vadd.s32 %v302, %v297
        %v304 = vadd.s32 %v302, %v298
        %v305 = vadd.s32 %v302, %v299
        %v306 = vadd.s32 %v302, %v300
        %vm307 = vcmp.lt.s32.totalorder %v303, 70
        %vm308 = vcmp.lt.s32.totalorder %v304, 70
        %vm309 = vcmp.lt.s32.totalorder %v305, 70
        %vm310 = vcmp.lt.s32.totalorder %v306, 70
        %vm311 = vcmp.ne.s32.totalorder %v209, 4294967196
        %vm312 = vcmp.ne.s32.totalorder %v210, 4294967196
        %vm313 = vcmp.ne.s32.totalorder %v211, 4294967196
        %vm314 = vcmp.ne.s32.totalorder %v212, 4294967196
        %vm315 = vmand %vm307, %vm311
        %vm316 = vmand %vm308, %vm312
        %vm317 = vmand %vm309, %vm313
        %vm318 = vmand %vm310, %vm314
        %v319 = vsel %vm315, %v292, 0.0
        %v320 = vsel %vm316, %v293, 0.0
        %v321 = vsel %vm317, %v294, 0.0
        %v322 = vsel %vm318, %v295, 0.0
        %vm323 = vcmask 7168
        %v324 = vsel %vm323, %v319, 0.0
        %v325 = vsel %vm323, %v320, 0.0
        %v326 = vadd.f32 %v324, %v325
        %v327 = vsel %vm323, %v321, 0.0
        %v328 = vadd.f32 %v326, %v327
        %v329 = vsel %vm323, %v322, 0.0
        %v330 = vadd.f32 %v328, %v329
        %331 = vadd.xlane.f32.xlu0 %v330
        %v332 = vpop.xlane.xlu0 %331
        %v333 = vrot.slane %v332, 4
        %v334 = vadd.f32 %v332, %v333
        %v335 = vrot.slane %v334, 2
        %v336 = vadd.f32 %v334, %v335
        %v337 = vrot.slane %v336, 1
        %v338 = vadd.f32 %v336, %v337
        %s339 = vtos %v338
        %v340 = vsel %vm315, 1.0, 0.0
        %v341 = vsel %vm316, 1.0, 0.0
        %v342 = vsel %vm317, 1.0, 0.0
        %v343 = vsel %vm318, 1.0, 0.0
        %v344 = vsel %vm323, %v340, 0.0
        %v345 = vsel %vm323, %v341, 0.0
        %v346 = vadd.f32 %v344, %v345
        %v347 = vsel %vm323, %v342, 0.0
        %v348 = vadd.f32 %v346, %v347
        %v349 = vsel %vm323, %v343, 0.0
        %v350 = vadd.f32 %v348, %v349
        %351 = vadd.xlane.f32.xlu0 %v350
        %v352 = vpop.xlane.xlu0 %351
        %v353 = vrot.slane %v352, 4
        %v354 = vadd.f32 %v352, %v353
        %v355 = vrot.slane %v354, 2
        %v356 = vadd.f32 %v354, %v355
        %v357 = vrot.slane %v356, 1
        %v358 = vadd.f32 %v356, %v357
        %s359 = vtos %v358
        %vm360 = vcmp.eq.s32.totalorder %v251, 0
        %vm361 = vcmp.eq.s32.totalorder %v251, 1
        %v362 = vstv %s359
        %v363 = vsel %vm361, %v362, 0.0
        %v364 = vstv %s339
        %v365 = vsel %vm360, %v364, %v363
        %366 = vst [vmem:[%s176] sm:$0x1] %v365
        %s367 = sand.u32 %s76, 1
        %s368 = scalar_lea.sflag [#allocation3], %s367
        %s369 = sand.u32 %s76, 1
        %s370 = scalar_lea.vmem [#allocation2], %s369
        // Predicated region
        $region29: #{tpu_custom_call.1} parent=27 // pred_check
          %p371 = pneg %p86
        $region30: #{tpu_custom_call.1} parent=27 // pred_check_branch
          %373 = sbr.rel (%p371) target = $region32
        $region31: #{tpu_custom_call.1} parent=27 // pred_region
          %s375 = ssub.s32 16, 16
          %376 = vsyncadd %s368, %s375
          %s377 = smul.addr %s16, 16
          %s378 = scalar_lea.hbm %s2, %s377
          %s380 = sshll.u32 %s370, 4
          %s381 = int_to_ptr.vmem [resolvable:$true] %s380
          %383 = dma.vmem_to_hbm [thread:$0]  %s381, 16, %s378, %s368
        $region32: #{tpu_custom_call.1} parent=27 // pred_fallthru
          _
      $region28: #{tpu_custom_call.1} parent=5 // pred_fallthru
        _
      %p384 = scmp.le.s32.totalorder 2, %s11
      // Predicated region
      $region33: #{tpu_custom_call.1} parent=5 // pred_check
        %p385 = pneg %p384
      $region34: #{tpu_custom_call.1} parent=5 // pred_check_branch
        %387 = sbr.rel (%p385) target = $region36
      $region35: #{tpu_custom_call.1} parent=5 // pred_region
        %s388 = ssub.s32 %s11, 2
        // Predicated region
        $region37: #{tpu_custom_call.1} parent=35 // pred_check
          %p389 = pneg %p92
        $region38: #{tpu_custom_call.1} parent=35 // pred_check_branch
          %391 = sbr.rel (%p389) target = $region40
        $region39: #{tpu_custom_call.1} parent=35 // pred_region
          %s392 = sand.u32 %s77, 1
          %s393 = scalar_lea.sflag [#allocation3], %s392
          %s394 = sand.u32 %s77, 1
          %s395 = scalar_lea.vmem [#allocation2], %s394
          %396 = dma.done %s393, 16
        $region40: #{tpu_custom_call.1} parent=35 // pred_fallthru
          _
      $region36: #{tpu_custom_call.1} parent=5 // pred_fallthru
        _
    $region6: #{tpu_custom_call.1} parent=1 // loop_footer
      %s15 = sadd.s32 1, %s11
    $region7: #{tpu_custom_call.1} parent=1 // loop_footer_branch
      %10 = sbr.rel target = $region3
    $region8: #{tpu_custom_call.1} parent=1 // loop_exit
      _
    %397 = vsyncpa [#allocation3], 1
    %s398 = scalar_lea.sflag [#allocation3], 1
    %399 = vsyncpa %s398, 1

</llo_original>
